<compile_context>
chip_gen: v5e
topology: v5e:2x2
jax: 0.10.0
libtpu: 0.0.40
codegen_flags: <defaults>
</compile_context>

<pallas_src>
import functools

import jax
import jax.numpy as jnp
from jax import lax
from jax.experimental import pallas as pl
from jax.experimental.pallas import tpu as pltpu

EPS = 1e-6  # matches module default


def _faim_head_kernel(params_ref,      # SMEM scalars: [lmbda, scale]
                      x_ref,           # (tb, d)  streamed batch tile
                      mu_scaled_ref,   # (C, d)   mu * sigma_diag       (resident)
                      sigma_row_ref,   # (1, d)   sigma_diag            (resident)
                      beta_row_ref,    # (1, d)   beta                  (resident)
                      mu_quad_ref,     # (C, 1)   mu Σ mu^T per class   (resident, f32)
                      mub_ref,         # (C, 1)   beta . mu per class   (resident, f32)
                      out_ref,         # (C, tb)  transposed logits tile
                      *, eps):
    lmbda = params_ref[0]
    scale = params_ref[1]

    x = x_ref[...]                                   # (tb, d)

    # contract last dims of both operands: A @ B^T without explicit transposes
    contract_last = (((1,), (1,)), ((), ()))

    # Only large MXU matmul: (xΣμ^T)^T  -> (C, tb)
    cross_t = lax.dot_general(mu_scaled_ref[...], x, contract_last,
                              preferred_element_type=jnp.float32)
    # xΣx^T per batch row, laid out on lanes: (1, tb)
    x_quad_t = lax.dot_general(sigma_row_ref[...], x * x, contract_last,
                               preferred_element_type=jnp.float32)
    # β·x per batch row: (1, tb)
    xb_t = lax.dot_general(beta_row_ref[...], x, contract_last,
                           preferred_element_type=jnp.float32)

    # diff Σ diff^T = xΣx^T - 2 xΣμ^T + μΣμ^T   (Σ diagonal ⇒ symmetric)
    quad_t = x_quad_t + mu_quad_ref[...] - 2.0 * cross_t          # (C, tb), f32
    quad_t = jnp.maximum(quad_t, 0.0)          # guard cancellation -> no NaN in sqrt
    beta_dot_t = xb_t - mub_ref[...]                               # (C, tb), f32

    riemannian = jnp.sqrt(quad_t + eps)
    directional = lmbda * jnp.sqrt(beta_dot_t * beta_dot_t + eps)
    out_ref[...] = (-scale * (riemannian + directional)).astype(out_ref.dtype)


def faim_head(x, mu, log_sigma_diag, beta, lmbda, scale, *, eps=EPS, tb=128):
    """FAIM head forward. x: [B, d], mu: [C, d], log_sigma_diag/beta: [d]."""
    B, d = x.shape
    C = mu.shape[0]
    compute_dtype = x.dtype            # keep streamed tiles in the caller's dtype

    # ---- batch-independent terms, hoisted out of the grid loop (tiny XLA ops) ----
    sigma_diag = jnp.exp(log_sigma_diag.astype(jnp.float32)) + eps        # (d,)
    mu_f32 = mu.astype(jnp.float32)
    beta_f32 = beta.astype(jnp.float32)
    mu_scaled = mu_f32 * sigma_diag[None, :]                              # (C, d)
    mu_quad = jnp.sum(mu_scaled * mu_f32, axis=-1, keepdims=True)         # (C, 1)
    mub = (mu_f32 @ beta_f32)[:, None]                                    # (C, 1)

    # ---- pad batch to a tile multiple; padded rows are sliced off below ----
    b_pad = pl.cdiv(B, tb) * tb
    x_in = x if b_pad == B else jnp.pad(x, ((0, b_pad - B), (0, 0)))
    grid = b_pad // tb

    params = jnp.array([lmbda, scale], dtype=jnp.float32)

    isz = jnp.dtype(compute_dtype).itemsize
    cost = pl.CostEstimate(
        flops=2 * b_pad * C * d + 4 * b_pad * d + 8 * b_pad * C,
        transcendentals=2 * b_pad * C,
        bytes_accessed=b_pad * d * isz + C * d * isz + C * b_pad * isz,
    )

    kernel = functools.partial(_faim_head_kernel, eps=eps)

    out_t = pl.pallas_call(
        kernel,
        out_shape=jax.ShapeDtypeStruct((C, b_pad), compute_dtype),
        grid_spec=pltpu.PrefetchScalarGridSpec(
            num_scalar_prefetch=1,                        # params -> SMEM
            grid=(grid,),
            in_specs=[
                pl.BlockSpec((tb, d), lambda i, p: (i, 0)),   # x tile (streamed)
                pl.BlockSpec((C, d), lambda i, p: (0, 0)),    # mu * sigma (resident)
                pl.BlockSpec((1, d), lambda i, p: (0, 0)),    # sigma diag (resident)
                pl.BlockSpec((1, d), lambda i, p: (0, 0)),    # beta       (resident)
                pl.BlockSpec((C, 1), lambda i, p: (0, 0)),    # mu Σ mu^T  (resident)
                pl.BlockSpec((C, 1), lambda i, p: (0, 0)),    # beta . mu  (resident)
            ],
            out_specs=pl.BlockSpec((C, tb), lambda i, p: (0, i)),
        ),
        compiler_params=pltpu.CompilerParams(
            dimension_semantics=("parallel",)),
        cost_estimate=cost,
    )(params,
      x_in.astype(compute_dtype),
      mu_scaled.astype(compute_dtype),
      sigma_diag.reshape(1, d).astype(compute_dtype),
      beta_f32.reshape(1, d).astype(compute_dtype),
      mu_quad,                        # f32
      mub)                            # f32

    # lane-dense (C, b_pad) block back to [B, C]
    return out_t.T[:B]


def faim_head_reference(x, mu, sigma, beta, lmbda, scale, eps=EPS):
    """Pure-JAX reference mirroring the PyTorch forward (diff-based einsums)."""
    diff = x[:, None, :] - mu[None, :, :]                       # (B, C, d)
    quad = jnp.einsum('bcd,df,bcf->bc', diff, sigma, diff)
    beta_dot = jnp.einsum('d,bcd->bc', beta, diff)
    riemannian = jnp.sqrt(quad + eps)
    directional = lmbda * jnp.sqrt(beta_dot * beta_dot + eps)
    return -scale * (riemannian + directional)


if __name__ == "__main__":
    # small shapes: batch=16, in_features=64, num_classes=32
    B, d, C = 16, 64, 32
    lmbda_init, scale_init = 0.1, 10.0

    key = jax.random.PRNGKey(0)
    k_x, k_mu, k_beta = jax.random.split(key, 3)

    x = jax.random.normal(k_x, (B, d), dtype=jnp.float32)

    # parameter init mirroring FAIMHead.__init__ / _init_parameters (full_sigma=False)
    xavier_std = (2.0 / (C + d)) ** 0.5
    mu = xavier_std * jax.random.normal(k_mu, (C, d), dtype=jnp.float32)
    beta = 0.1 * jax.random.normal(k_beta, (d,), dtype=jnp.float32)
    log_sigma_diag = jnp.zeros((d,), dtype=jnp.float32)

    logits = faim_head(x, mu, log_sigma_diag, beta, lmbda_init, scale_init, tb=128)
    logits = jax.block_until_ready(logits)

    sigma_full = jnp.diag(jnp.exp(log_sigma_diag)) + EPS * jnp.eye(d, dtype=jnp.float32)
    ref = faim_head_reference(x, mu, sigma_full, beta, lmbda_init, scale_init)

    assert logits.shape == (B, C), logits.shape
    assert jnp.allclose(logits, ref, rtol=1e-4, atol=1e-4), (
        float(jnp.max(jnp.abs(logits - ref))))

    print("KERNEL_OK")
</pallas_src>

<mosaic_0001>
module attributes {stable_mosaic.version = 11 : i64} {
  func.func @_faim_head_kernel(%arg0: i32, %arg1: memref<2xf32, #tpu.memory_space<smem>>, %arg2: memref<128x64xf32, #tpu.memory_space<vmem>>, %arg3: memref<32x64xf32, #tpu.memory_space<vmem>>, %arg4: memref<1x64xf32, #tpu.memory_space<vmem>>, %arg5: memref<1x64xf32, #tpu.memory_space<vmem>>, %arg6: memref<32x1xf32, #tpu.memory_space<vmem>>, %arg7: memref<32x1xf32, #tpu.memory_space<vmem>>, %arg8: memref<32x128xf32, #tpu.memory_space<vmem>>) attributes {dimension_semantics = [#tpu.dimension_semantics<parallel>], iteration_bounds = array<i64: 1>, scalar_prefetch = 1 : i64, scratch_operands = 0 : i64, tpu.core_type = #tpu.core_type<tc>, window_params = [{transform_indices = @transform_0, window_bounds = array<i64: 128, 64>}, {pipeline_mode = #tpu.pipeline_mode<synchronous>, transform_indices = @transform_1, window_bounds = array<i64: 32, 64>}, {pipeline_mode = #tpu.pipeline_mode<synchronous>, transform_indices = @transform_2, window_bounds = array<i64: 1, 64>}, {pipeline_mode = #tpu.pipeline_mode<synchronous>, transform_indices = @transform_3, window_bounds = array<i64: 1, 64>}, {pipeline_mode = #tpu.pipeline_mode<synchronous>, transform_indices = @transform_4, window_bounds = array<i64: 32, 1>}, {pipeline_mode = #tpu.pipeline_mode<synchronous>, transform_indices = @transform_5, window_bounds = array<i64: 32, 1>}, {transform_indices = @transform_6, window_bounds = array<i64: 32, 128>}]} {
    %c0 = arith.constant 0 : index
    %0 = memref.load %arg1[%c0] : memref<2xf32, #tpu.memory_space<smem>>
    %c1 = arith.constant 1 : index
    %1 = memref.load %arg1[%c1] : memref<2xf32, #tpu.memory_space<smem>>
    %c0_0 = arith.constant 0 : index
    %c0_1 = arith.constant 0 : index
    %2 = vector.load %arg2[%c0_0, %c0_1] : memref<128x64xf32, #tpu.memory_space<vmem>>, vector<128x64xf32>
    %c0_2 = arith.constant 0 : index
    %c0_3 = arith.constant 0 : index
    %3 = vector.load %arg3[%c0_2, %c0_3] : memref<32x64xf32, #tpu.memory_space<vmem>>, vector<32x64xf32>
    %cst = arith.constant dense<0.000000e+00> : vector<32x128xf32>
    %4 = tpu.matmul %3, %2, %cst {dimension_numbers = #tpu.dot_dimension_numbers<[1], [1], [0], [0], [0, 0, 1, 0], [], []>} : vector<32x64xf32>, vector<128x64xf32>, vector<32x128xf32> -> vector<32x128xf32>
    %c0_4 = arith.constant 0 : index
    %c0_5 = arith.constant 0 : index
    %5 = vector.load %arg4[%c0_4, %c0_5] : memref<1x64xf32, #tpu.memory_space<vmem>>, vector<1x64xf32>
    %6 = arith.mulf %2, %2 : vector<128x64xf32>
    %cst_6 = arith.constant dense<0.000000e+00> : vector<1x128xf32>
    %7 = tpu.matmul %5, %6, %cst_6 {dimension_numbers = #tpu.dot_dimension_numbers<[1], [1], [0], [0], [0, 0, 1, 0], [], []>} : vector<1x64xf32>, vector<128x64xf32>, vector<1x128xf32> -> vector<1x128xf32>
    %c0_7 = arith.constant 0 : index
    %c0_8 = arith.constant 0 : index
    %8 = vector.load %arg5[%c0_7, %c0_8] : memref<1x64xf32, #tpu.memory_space<vmem>>, vector<1x64xf32>
    %cst_9 = arith.constant dense<0.000000e+00> : vector<1x128xf32>
    %9 = tpu.matmul %8, %2, %cst_9 {dimension_numbers = #tpu.dot_dimension_numbers<[1], [1], [0], [0], [0, 0, 1, 0], [], []>} : vector<1x64xf32>, vector<128x64xf32>, vector<1x128xf32> -> vector<1x128xf32>
    %c0_10 = arith.constant 0 : index
    %c0_11 = arith.constant 0 : index
    %10 = vector.load %arg6[%c0_10, %c0_11] : memref<32x1xf32, #tpu.memory_space<vmem>>, vector<32x1xf32>
    %11 = vector.broadcast %7 : vector<1x128xf32> to vector<32x128xf32>
    %12 = vector.broadcast %10 : vector<32x1xf32> to vector<32x128xf32>
    %13 = arith.addf %11, %12 : vector<32x128xf32>
    %cst_12 = arith.constant 2.000000e+00 : f32
    %14 = vector.broadcast %cst_12 : f32 to vector<32x128xf32>
    %15 = arith.mulf %14, %4 : vector<32x128xf32>
    %16 = arith.subf %13, %15 : vector<32x128xf32>
    %cst_13 = arith.constant 0.000000e+00 : f32
    %17 = vector.broadcast %cst_13 : f32 to vector<32x128xf32>
    %18 = arith.maximumf %16, %17 : vector<32x128xf32>
    %c0_14 = arith.constant 0 : index
    %c0_15 = arith.constant 0 : index
    %19 = vector.load %arg7[%c0_14, %c0_15] : memref<32x1xf32, #tpu.memory_space<vmem>>, vector<32x1xf32>
    %20 = vector.broadcast %9 : vector<1x128xf32> to vector<32x128xf32>
    %21 = vector.broadcast %19 : vector<32x1xf32> to vector<32x128xf32>
    %22 = arith.subf %20, %21 : vector<32x128xf32>
    %cst_16 = arith.constant 9.99999997E-7 : f32
    %23 = vector.broadcast %cst_16 : f32 to vector<32x128xf32>
    %24 = arith.addf %18, %23 : vector<32x128xf32>
    %25 = math.sqrt %24 : vector<32x128xf32>
    %26 = arith.mulf %22, %22 : vector<32x128xf32>
    %cst_17 = arith.constant 9.99999997E-7 : f32
    %27 = vector.broadcast %cst_17 : f32 to vector<32x128xf32>
    %28 = arith.addf %26, %27 : vector<32x128xf32>
    %29 = math.sqrt %28 : vector<32x128xf32>
    %30 = vector.broadcast %0 : f32 to vector<32x128xf32>
    %31 = arith.mulf %30, %29 : vector<32x128xf32>
    %cst_18 = arith.constant 0.000000e+00 : f32
    %32 = arith.subf %cst_18, %1 : f32
    %33 = arith.addf %25, %31 : vector<32x128xf32>
    %34 = vector.broadcast %32 : f32 to vector<32x128xf32>
    %35 = arith.mulf %34, %33 : vector<32x128xf32>
    %c0_19 = arith.constant 0 : index
    %c0_20 = arith.constant 0 : index
    %36 = vector.load %arg8[%c0_19, %c0_20] : memref<32x128xf32, #tpu.memory_space<vmem>>, vector<32x128xf32>
    tpu.vector_store %arg8[%c0_19, %c0_20], %35 {strides = array<i32>} : memref<32x128xf32, #tpu.memory_space<vmem>>, vector<32x128xf32>,
    return
  }
  func.func @transform_0(%arg0: i32, %arg1: memref<2xf32, #tpu.memory_space<smem>>) -> (i32, i32) {
    %c0_i32 = arith.constant 0 : i32
    %c0_i32_0 = arith.constant 0 : i32
    return %arg0, %c0_i32 : i32, i32
  }
  func.func @transform_1(%arg0: i32, %arg1: memref<2xf32, #tpu.memory_space<smem>>) -> (i32, i32) {
    %c0_i32 = arith.constant 0 : i32
    %c0_i32_0 = arith.constant 0 : i32
    %c0_i32_1 = arith.constant 0 : i32
    return %c0_i32, %c0_i32_0 : i32, i32
  }
  func.func @transform_2(%arg0: i32, %arg1: memref<2xf32, #tpu.memory_space<smem>>) -> (i32, i32) {
    %c0_i32 = arith.constant 0 : i32
    %c0_i32_0 = arith.constant 0 : i32
    %c0_i32_1 = arith.constant 0 : i32
    return %c0_i32, %c0_i32_0 : i32, i32
  }
  func.func @transform_3(%arg0: i32, %arg1: memref<2xf32, #tpu.memory_space<smem>>) -> (i32, i32) {
    %c0_i32 = arith.constant 0 : i32
    %c0_i32_0 = arith.constant 0 : i32
    %c0_i32_1 = arith.constant 0 : i32
    return %c0_i32, %c0_i32_0 : i32, i32
  }
  func.func @transform_4(%arg0: i32, %arg1: memref<2xf32, #tpu.memory_space<smem>>) -> (i32, i32) {
    %c0_i32 = arith.constant 0 : i32
    %c0_i32_0 = arith.constant 0 : i32
    %c0_i32_1 = arith.constant 0 : i32
    return %c0_i32, %c0_i32_0 : i32, i32
  }
  func.func @transform_5(%arg0: i32, %arg1: memref<2xf32, #tpu.memory_space<smem>>) -> (i32, i32) {
    %c0_i32 = arith.constant 0 : i32
    %c0_i32_0 = arith.constant 0 : i32
    %c0_i32_1 = arith.constant 0 : i32
    return %c0_i32, %c0_i32_0 : i32, i32
  }
  func.func @transform_6(%arg0: i32, %arg1: memref<2xf32, #tpu.memory_space<smem>>) -> (i32, i32) {
    %c0_i32 = arith.constant 0 : i32
    %c0_i32_0 = arith.constant 0 : i32
    return %c0_i32, %arg0 : i32, i32
  }
}

</mosaic_0001>

<llo_original>
// kernel: tpu_custom_call.1
$region0: #{tpu_custom_call.1}
  #allocation0 [shape = 'u32[]', space=smem, size = 0x4, offset = 0x4, fixed_abs, tag = 'smem constant byte address 0x4 - core index']
  #allocation1 [shape = 'u32[72,128]{1,0:T(1,128)}', space=vmem, size = 0x9000, scoped, tag = 'internal scratch']
  #allocation2 [shape = 's32[1]{0}', space=sflag, size = 0x4, scoped, tag = 'scoped memory for tpu_custom_call.1']
  #allocation3 [shape = 'u8[512]{0}', space=smem, size = 0x200, scoped, tag = 'prefetched SMEM operand 0']
  %s0 = inlined_call_operand.vmem [shape: f32[2], index: 0, kind: input, shape index: {}]
  %s1 = inlined_call_operand.vmem [shape: f32[128,64], index: 1, kind: input, shape index: {}]
  %s2 = inlined_call_operand.vmem [shape: f32[32,64], index: 2, kind: input, shape index: {}]
  %s3 = inlined_call_operand.vmem [shape: f32[1,64], index: 3, kind: input, shape index: {}]
  %s4 = inlined_call_operand.vmem [shape: f32[1,64], index: 4, kind: input, shape index: {}]
  %s5 = inlined_call_operand.vmem [shape: f32[32,1], index: 5, kind: input, shape index: {}]
  %s6 = inlined_call_operand.vmem [shape: f32[32,1], index: 6, kind: input, shape index: {}]
  %s7 = inlined_call_operand.hbm [shape: f32[32,128], index: 7, kind: output, shape index: {}]
  %s8 = sld [smem:[#allocation0]]
  $region34: #{tpu_custom_call.1} parent=0
    _
  %s10 = ssub.s32 1, %s8
  %s11 = scalar_select 0, %s10, %s8
  %s13 = sshll.u32 %s0, 4
  %s14 = int_to_ptr.vmem [resolvable:$true] %s13
  %16 = dma.vmem_to_smem %s14, 16, [#allocation3], [#allocation2]
  %18 = dma.done [#allocation2], 16
  %19 = sfence
  $region1: #{tpu_custom_call.1} parent=0
    #allocation4 [shape = 'u8[16384]{0}', space=vmem, size = 0x4000, scoped, tag = 'output window, operand 0, single buffered']
    #allocation5 [shape = 's32[1]{0}', space=sflag, size = 0x4, scoped, tag = 'scoped memory for tpu_custom_call.1']
    %20 = vsyncpa [#allocation5], 0
    // Predicated region
    $region2: #{tpu_custom_call.1} parent=1 // pred_check
      _
    $region3: #{tpu_custom_call.1} parent=1 // pred_check_branch
      %22 = sbr.rel (0) target = $region5
    $region4: #{tpu_custom_call.1} parent=1 // pred_region
      _
    $region5: #{tpu_custom_call.1} parent=1 // pred_fallthru
      _
    // Predicated region
    $region6: #{tpu_custom_call.1} parent=1 // pred_check
      _
    $region7: #{tpu_custom_call.1} parent=1 // pred_check_branch
      %24 = sbr.rel (0) target = $region9
    $region8: #{tpu_custom_call.1} parent=1 // pred_region
      _
    $region9: #{tpu_custom_call.1} parent=1 // pred_fallthru
      _
    // Predicated region
    $region10: #{tpu_custom_call.1} parent=1 // pred_check
      _
    $region11: #{tpu_custom_call.1} parent=1 // pred_check_branch
      %26 = sbr.rel (0) target = $region13
    $region12: #{tpu_custom_call.1} parent=1 // pred_region
      _
    $region13: #{tpu_custom_call.1} parent=1 // pred_fallthru
      _
    // Predicated region
    $region14: #{tpu_custom_call.1} parent=1 // pred_check
      _
    $region15: #{tpu_custom_call.1} parent=1 // pred_check_branch
      %28 = sbr.rel (0) target = $region17
    $region16: #{tpu_custom_call.1} parent=1 // pred_region
      _
    $region17: #{tpu_custom_call.1} parent=1 // pred_fallthru
      _
    // Predicated region
    $region18: #{tpu_custom_call.1} parent=1 // pred_check
      _
    $region19: #{tpu_custom_call.1} parent=1 // pred_check_branch
      %30 = sbr.rel (0) target = $region21
    $region20: #{tpu_custom_call.1} parent=1 // pred_region
      _
    $region21: #{tpu_custom_call.1} parent=1 // pred_fallthru
      _
    // Predicated region
    $region22: #{tpu_custom_call.1} parent=1 // pred_check
      _
    $region23: #{tpu_custom_call.1} parent=1 // pred_check_branch
      %32 = sbr.rel (0) target = $region25
    $region24: #{tpu_custom_call.1} parent=1 // pred_region
      _
    $region25: #{tpu_custom_call.1} parent=1 // pred_fallthru
      _
    %s33 = sld [smem:[#allocation3]]
    %s34 = sld [smem:[#allocation3 + $0x1]]
    %v35 = vld [vmem:[%s1] sm:$0xff]
    %v36 = vld [vmem:[%s1 + $0x8] sm:$0xff]
    %v37 = vld [vmem:[%s1 + $0x10] sm:$0xff]
    %v38 = vld [vmem:[%s1 + $0x18] sm:$0xff]
    %v39 = vld [vmem:[%s1 + $0x20] sm:$0xff]
    %v40 = vld [vmem:[%s1 + $0x28] sm:$0xff]
    %v41 = vld [vmem:[%s1 + $0x30] sm:$0xff]
    %v42 = vld [vmem:[%s1 + $0x38] sm:$0xff]
    %v43 = vld [vmem:[%s1 + $0x40] sm:$0xff]
    %v44 = vld [vmem:[%s1 + $0x48] sm:$0xff]
    %v45 = vld [vmem:[%s1 + $0x50] sm:$0xff]
    %v46 = vld [vmem:[%s1 + $0x58] sm:$0xff]
    %v47 = vld [vmem:[%s1 + $0x60] sm:$0xff]
    %v48 = vld [vmem:[%s1 + $0x68] sm:$0xff]
    %v49 = vld [vmem:[%s1 + $0x70] sm:$0xff]
    %v50 = vld [vmem:[%s1 + $0x78] sm:$0xff]
    %v51 = vld [vmem:[%s2] sm:$0xff]
    %v52 = vld [vmem:[%s2 + $0x8] sm:$0xff]
    %v53 = vld [vmem:[%s2 + $0x10] sm:$0xff]
    %v54 = vld [vmem:[%s2 + $0x18] sm:$0xff]
    %vm55 = vcmask 523264
    %v57 = vsel %vm55, %v51, 0
    %v60 = vsel %vm55, %v52, 0
    %v63 = vsel %vm55, %v53, 0
    %v66 = vsel %vm55, %v54, 0
    %v69 = vsel %vm55, %v35, 0
    %v72 = vsel %vm55, %v36, 0
    %v75 = vsel %vm55, %v37, 0
    %v78 = vsel %vm55, %v38, 0
    %v81 = vsel %vm55, %v39, 0
    %v84 = vsel %vm55, %v40, 0
    %v87 = vsel %vm55, %v41, 0
    %v90 = vsel %vm55, %v42, 0
    %v93 = vsel %vm55, %v43, 0
    %v96 = vsel %vm55, %v44, 0
    %v99 = vsel %vm55, %v45, 0
    %v102 = vsel %vm55, %v46, 0
    %v105 = vsel %vm55, %v47, 0
    %v108 = vsel %vm55, %v48, 0
    %v111 = vsel %vm55, %v49, 0
    %v114 = vsel %vm55, %v50, 0
    %116 = vmatpush.xpose.msra.mxu0 %v114
    %117 = vmatpush.xpose.msra.mxu0 %v111
    %118 = vmatpush.xpose.msra.mxu0 %v108
    %119 = vmatpush.xpose.msra.mxu0 %v105
    %120 = vmatpush.xpose.msra.mxu0 %v102
    %121 = vmatpush.xpose.msra.mxu0 %v99
    %122 = vmatpush.xpose.msra.mxu0 %v96
    %123 = vmatpush.xpose.msra.mxu0 %v93
    %124 = vmatpush.xpose.msra.mxu0 %v90
    %125 = vmatpush.xpose.msra.mxu0 %v87
    %126 = vmatpush.xpose.msra.mxu0 %v84
    %127 = vmatpush.xpose.msra.mxu0 %v81
    %128 = vmatpush.xpose.msra.mxu0 %v78
    %129 = vmatpush.xpose.msra.mxu0 %v75
    %130 = vmatpush.xpose.msra.mxu0 %v72
    %131 = vmatpush.xpose.msra.mxu0 %v69
    %132 = vmatmul.f32.gmra.mxu0 %v57
    %v133 = vpop.f32.mrf.mxu0
    %v134 = vadd.f32 0.0, %v133
    %135 = vmatmul.f32.gmra.mxu0 %v60
    %v136 = vpop.f32.mrf.mxu0
    %v137 = vadd.f32 0.0, %v136
    %138 = vmatmul.f32.gmra.mxu0 %v63
    %v139 = vpop.f32.mrf.mxu0
    %v140 = vadd.f32 0.0, %v139
    %141 = vmatmul.f32.gmra.mxu0 %v66
    %v142 = vpop.f32.mrf.mxu0
    %v143 = vadd.f32 0.0, %v142
    %144 = vdwg.mxu0
    %v145 = vld [vmem:[%s3] sm:$0x1]
    %v146 = vmul.f32 %v35, %v35
    %v147 = vmul.f32 %v36, %v36
    %v148 = vmul.f32 %v37, %v37
    %v149 = vmul.f32 %v38, %v38
    %v150 = vmul.f32 %v39, %v39
    %v151 = vmul.f32 %v40, %v40
    %v152 = vmul.f32 %v41, %v41
    %v153 = vmul.f32 %v42, %v42
    %v154 = vmul.f32 %v43, %v43
    %v155 = vmul.f32 %v44, %v44
    %v156 = vmul.f32 %v45, %v45
    %v157 = vmul.f32 %v46, %v46
    %v158 = vmul.f32 %v47, %v47
    %v159 = vmul.f32 %v48, %v48
    %v160 = vmul.f32 %v49, %v49
    %v161 = vmul.f32 %v50, %v50
    %v163 = vsel %vm55, %v145, 0
    %v166 = vsel %vm55, %v146, 0
    %v169 = vsel %vm55, %v147, 0
    %v172 = vsel %vm55, %v148, 0
    %v175 = vsel %vm55, %v149, 0
    %v178 = vsel %vm55, %v150, 0
    %v181 = vsel %vm55, %v151, 0
    %v184 = vsel %vm55, %v152, 0
    %v187 = vsel %vm55, %v153, 0
    %v190 = vsel %vm55, %v154, 0
    %v193 = vsel %vm55, %v155, 0
    %v196 = vsel %vm55, %v156, 0
    %v199 = vsel %vm55, %v157, 0
    %v202 = vsel %vm55, %v158, 0
    %v205 = vsel %vm55, %v159, 0
    %v208 = vsel %vm55, %v160, 0
    %v211 = vsel %vm55, %v161, 0
    %213 = vmatpush.xpose.msra.mxu0 %v211
    %214 = vmatpush.xpose.msra.mxu0 %v208
    %215 = vmatpush.xpose.msra.mxu0 %v205
    %216 = vmatpush.xpose.msra.mxu0 %v202
    %217 = vmatpush.xpose.msra.mxu0 %v199
    %218 = vmatpush.xpose.msra.mxu0 %v196
    %219 = vmatpush.xpose.msra.mxu0 %v193
    %220 = vmatpush.xpose.msra.mxu0 %v190
    %221 = vmatpush.xpose.msra.mxu0 %v187
    %222 = vmatpush.xpose.msra.mxu0 %v184
    %223 = vmatpush.xpose.msra.mxu0 %v181
    %224 = vmatpush.xpose.msra.mxu0 %v178
    %225 = vmatpush.xpose.msra.mxu0 %v175
    %226 = vmatpush.xpose.msra.mxu0 %v172
    %227 = vmatpush.xpose.msra.mxu0 %v169
    %228 = vmatpush.xpose.msra.mxu0 %v166
    %229 = vmatmul.f32.gmra.mxu0 %v163
    %v230 = vpop.f32.mrf.mxu0
    %v231 = vadd.f32 0.0, %v230
    %232 = vdwg.mxu0
    %v233 = vld [vmem:[%s4] sm:$0x1]
    %v235 = vsel %vm55, %v233, 0
    %237 = vmatpush.xpose.msra.mxu0 %v114
    %238 = vmatpush.xpose.msra.mxu0 %v111
    %239 = vmatpush.xpose.msra.mxu0 %v108
    %240 = vmatpush.xpose.msra.mxu0 %v105
    %241 = vmatpush.xpose.msra.mxu0 %v102
    %242 = vmatpush.xpose.msra.mxu0 %v99
    %243 = vmatpush.xpose.msra.mxu0 %v96
    %244 = vmatpush.xpose.msra.mxu0 %v93
    %245 = vmatpush.xpose.msra.mxu0 %v90
    %246 = vmatpush.xpose.msra.mxu0 %v87
    %247 = vmatpush.xpose.msra.mxu0 %v84
    %248 = vmatpush.xpose.msra.mxu0 %v81
    %249 = vmatpush.xpose.msra.mxu0 %v78
    %250 = vmatpush.xpose.msra.mxu0 %v75
    %251 = vmatpush.xpose.msra.mxu0 %v72
    %252 = vmatpush.xpose.msra.mxu0 %v69
    %253 = vmatmul.f32.gmra.mxu0 %v235
    %v254 = vpop.f32.mrf.mxu0
    %v255 = vadd.f32 0.0, %v254
    %256 = vdwg.mxu0
    %v257 = vld [vmem:[%s5] sm:$0xff]
    %v258 = vld [vmem:[%s5 + $0x8] sm:$0xff]
    %v259 = vld [vmem:[%s5 + $0x10] sm:$0xff]
    %v260 = vld [vmem:[%s5 + $0x18] sm:$0xff]
    %v261 = vperm.slane %v231, 0
    %263 = vset.pattern.permute.xlu0 0
    %264 = vperm.xlu0 %263, %v257
    %v265 = vpop.permute.xlu0 %264
    %268 = vset.pattern.permute.xlu0 0
    %269 = vperm.xlu0 %268, %v258
    %v270 = vpop.permute.xlu0 %269
    %273 = vset.pattern.permute.xlu0 0
    %274 = vperm.xlu0 %273, %v259
    %v275 = vpop.permute.xlu0 %274
    %278 = vset.pattern.permute.xlu0 0
    %279 = vperm.xlu0 %278, %v260
    %v280 = vpop.permute.xlu0 %279
    %v282 = vadd.f32 %v261, %v265
    %v283 = vadd.f32 %v261, %v270
    %v284 = vadd.f32 %v261, %v275
    %v285 = vadd.f32 %v261, %v280
    %v286 = vmul.f32 %v134, 2.0
    %v287 = vmul.f32 %v137, 2.0
    %v288 = vmul.f32 %v140, 2.0
    %v289 = vmul.f32 %v143, 2.0
    %v290 = vsub.f32 %v282, %v286
    %v291 = vsub.f32 %v283, %v287
    %v292 = vsub.f32 %v284, %v288
    %v293 = vsub.f32 %v285, %v289
    %v294 = vmax.f32 %v290, 0.0
    %v295 = vmax.f32 %v291, 0.0
    %v296 = vmax.f32 %v292, 0.0
    %v297 = vmax.f32 %v293, 0.0
    %v298 = vld [vmem:[%s6] sm:$0xff]
    %v299 = vld [vmem:[%s6 + $0x8] sm:$0xff]
    %v300 = vld [vmem:[%s6 + $0x10] sm:$0xff]
    %v301 = vld [vmem:[%s6 + $0x18] sm:$0xff]
    %v302 = vperm.slane %v255, 0
    %304 = vset.pattern.permute.xlu0 0
    %305 = vperm.xlu0 %304, %v298
    %v306 = vpop.permute.xlu0 %305
    %309 = vset.pattern.permute.xlu0 0
    %310 = vperm.xlu0 %309, %v299
    %v311 = vpop.permute.xlu0 %310
    %314 = vset.pattern.permute.xlu0 0
    %315 = vperm.xlu0 %314, %v300
    %v316 = vpop.permute.xlu0 %315
    %319 = vset.pattern.permute.xlu0 0
    %320 = vperm.xlu0 %319, %v301
    %v321 = vpop.permute.xlu0 %320
    %v323 = vsub.f32 %v302, %v306
    %v324 = vsub.f32 %v302, %v311
    %v325 = vsub.f32 %v302, %v316
    %v326 = vsub.f32 %v302, %v321
    %v327 = vadd.f32 %v294, 1e-06
    %v328 = vadd.f32 %v295, 1e-06
    %v329 = vadd.f32 %v296, 1e-06
    %v330 = vadd.f32 %v297, 1e-06
    %v331 = vrsqrt.pop %v327
    %v332 = vmul.f32 %v331, %v327
    %v333 = vmul.f32 %v332, %v331
    %v334 = vmul.f32 0.5, %v333
    %v335 = vsub.f32 1.5, %v334
    %v336 = vmul.f32 %v331, %v335
    %v337 = vmul.f32 %v327, %v336
    %vm338 = vcmp.eq.f32.partialorder %v327, inf
    %v339 = vsel %vm338, %v327, %v337
    %vm340 = vcmp.eq.f32.partialorder %v327, 0.0
    %v341 = vand.u32 %v327, 2147483648
    %v342 = vsel %vm340, %v341, %v339
    %v343 = vrsqrt.pop %v328
    %v344 = vmul.f32 %v343, %v328
    %v345 = vmul.f32 %v344, %v343
    %v346 = vmul.f32 0.5, %v345
    %v347 = vsub.f32 1.5, %v346
    %v348 = vmul.f32 %v343, %v347
    %v349 = vmul.f32 %v328, %v348
    %vm350 = vcmp.eq.f32.partialorder %v328, inf
    %v351 = vsel %vm350, %v328, %v349
    %vm352 = vcmp.eq.f32.partialorder %v328, 0.0
    %v353 = vand.u32 %v328, 2147483648
    %v354 = vsel %vm352, %v353, %v351
    %v355 = vrsqrt.pop %v329
    %v356 = vmul.f32 %v355, %v329
    %v357 = vmul.f32 %v356, %v355
    %v358 = vmul.f32 0.5, %v357
    %v359 = vsub.f32 1.5, %v358
    %v360 = vmul.f32 %v355, %v359
    %v361 = vmul.f32 %v329, %v360
    %vm362 = vcmp.eq.f32.partialorder %v329, inf
    %v363 = vsel %vm362, %v329, %v361
    %vm364 = vcmp.eq.f32.partialorder %v329, 0.0
    %v365 = vand.u32 %v329, 2147483648
    %v366 = vsel %vm364, %v365, %v363
    %v367 = vrsqrt.pop %v330
    %v368 = vmul.f32 %v367, %v330
    %v369 = vmul.f32 %v368, %v367
    %v370 = vmul.f32 0.5, %v369
    %v371 = vsub.f32 1.5, %v370
    %v372 = vmul.f32 %v367, %v371
    %v373 = vmul.f32 %v330, %v372
    %vm374 = vcmp.eq.f32.partialorder %v330, inf
    %v375 = vsel %vm374, %v330, %v373
    %vm376 = vcmp.eq.f32.partialorder %v330, 0.0
    %v377 = vand.u32 %v330, 2147483648
    %v378 = vsel %vm376, %v377, %v375
    %v379 = vmul.f32 %v323, %v323
    %v380 = vmul.f32 %v324, %v324
    %v381 = vmul.f32 %v325, %v325
    %v382 = vmul.f32 %v326, %v326
    %v383 = vadd.f32 %v379, 1e-06
    %v384 = vadd.f32 %v380, 1e-06
    %v385 = vadd.f32 %v381, 1e-06
    %v386 = vadd.f32 %v382, 1e-06
    %v387 = vrsqrt.pop %v383
    %v388 = vmul.f32 %v387, %v383
    %v389 = vmul.f32 %v388, %v387
    %v390 = vmul.f32 0.5, %v389
    %v391 = vsub.f32 1.5, %v390
    %v392 = vmul.f32 %v387, %v391
    %v393 = vmul.f32 %v383, %v392
    %vm394 = vcmp.eq.f32.partialorder %v383, inf
    %v395 = vsel %vm394, %v383, %v393
    %vm396 = vcmp.eq.f32.partialorder %v383, 0.0
    %v397 = vand.u32 %v383, 2147483648
    %v398 = vsel %vm396, %v397, %v395
    %v399 = vrsqrt.pop %v384
    %v400 = vmul.f32 %v399, %v384
    %v401 = vmul.f32 %v400, %v399
    %v402 = vmul.f32 0.5, %v401
    %v403 = vsub.f32 1.5, %v402
    %v404 = vmul.f32 %v399, %v403
    %v405 = vmul.f32 %v384, %v404
    %vm406 = vcmp.eq.f32.partialorder %v384, inf
    %v407 = vsel %vm406, %v384, %v405
    %vm408 = vcmp.eq.f32.partialorder %v384, 0.0
    %v409 = vand.u32 %v384, 2147483648
    %v410 = vsel %vm408, %v409, %v407
    %v411 = vrsqrt.pop %v385
    %v412 = vmul.f32 %v411, %v385
    %v413 = vmul.f32 %v412, %v411
    %v414 = vmul.f32 0.5, %v413
    %v415 = vsub.f32 1.5, %v414
    %v416 = vmul.f32 %v411, %v415
    %v417 = vmul.f32 %v385, %v416
    %vm418 = vcmp.eq.f32.partialorder %v385, inf
    %v419 = vsel %vm418, %v385, %v417
    %vm420 = vcmp.eq.f32.partialorder %v385, 0.0
    %v421 = vand.u32 %v385, 2147483648
    %v422 = vsel %vm420, %v421, %v419
    %v423 = vrsqrt.pop %v386
    %v424 = vmul.f32 %v423, %v386
    %v425 = vmul.f32 %v424, %v423
    %v426 = vmul.f32 0.5, %v425
    %v427 = vsub.f32 1.5, %v426
    %v428 = vmul.f32 %v423, %v427
    %v429 = vmul.f32 %v386, %v428
    %vm430 = vcmp.eq.f32.partialorder %v386, inf
    %v431 = vsel %vm430, %v386, %v429
    %vm432 = vcmp.eq.f32.partialorder %v386, 0.0
    %v433 = vand.u32 %v386, 2147483648
    %v434 = vsel %vm432, %v433, %v431
    %v435 = vstv %s33
    %v436 = vmul.f32 %v435, %v398
    %v437 = vmul.f32 %v435, %v410
    %v438 = vmul.f32 %v435, %v422
    %v439 = vmul.f32 %v435, %v434
    %s440 = ssub.f32 0.0, %s34
    %v441 = vadd.f32 %v342, %v436
    %v442 = vadd.f32 %v354, %v437
    %v443 = vadd.f32 %v366, %v438
    %v444 = vadd.f32 %v378, %v439
    %v445 = vstv %s440
    %v446 = vmul.f32 %v445, %v441
    %v447 = vmul.f32 %v445, %v442
    %v448 = vmul.f32 %v445, %v443
    %v449 = vmul.f32 %v445, %v444
    %450 = vst [vmem:[#allocation4] sm:$0xff] %v446
    %451 = vst [vmem:[#allocation4 + $0x8] sm:$0xff] %v447
    %452 = vst [vmem:[#allocation4 + $0x10] sm:$0xff] %v448
    %453 = vst [vmem:[#allocation4 + $0x18] sm:$0xff] %v449
    // Predicated region
    $region26: #{tpu_custom_call.1} parent=1 // pred_check
      _
    $region27: #{tpu_custom_call.1} parent=1 // pred_check_branch
      %455 = sbr.rel (0) target = $region29
    $region28: #{tpu_custom_call.1} parent=1 // pred_region
      %457 = vsyncadd [#allocation5], 0
      %s458 = sshll.u32 [#allocation4], 4
      %s459 = int_to_ptr.vmem [resolvable:$true] %s458
      %s460 = sshll.u32 %s7, 4
      %s461 = int_to_ptr.hbm [resolvable:$true] %s460
      %466 = dma.vmem_to_hbm [thread:$0]  %s459, 512, %s461, [#allocation5], 128, 128, 8
    $region29: #{tpu_custom_call.1} parent=1 // pred_fallthru
      _
    // Predicated region
    $region30: #{tpu_custom_call.1} parent=1 // pred_check
      _
    $region31: #{tpu_custom_call.1} parent=1 // pred_check_branch
      %468 = sbr.rel (0) target = $region33
    $region32: #{tpu_custom_call.1} parent=1 // pred_region
      %470 = dma.done [#allocation5], 512
    $region33: #{tpu_custom_call.1} parent=1 // pred_fallthru
      _
    %471 = vsyncpa [#allocation5], 1

</llo_original>
